<compile_context>
chip_gen: v7x
topology: tpu7x:2x2x1
jax: 0.10.0
libtpu: 0.0.40
codegen_flags: <defaults>
</compile_context>

<pallas_src>
import functools
import math

import jax
import jax.numpy as jnp
from jax import lax
from jax.experimental import pallas as pl
from jax.experimental.pallas import tpu as pltpu


def _token_embedding_kernel(x_ref, w_ref, o_ref):
    # x_ref: (Bt, L, c_in)   w_ref: (3*c_in, d_model)   o_ref: (Bt, L, d_model)
    bt, L, _ = x_ref.shape
    x3_rows = []
    for b in range(bt):                       # static, unrolled at trace time
        x = x_ref[b]                          # (L, c_in)
        x_prev = pltpu.roll(x, shift=1, axis=0)      # x[(t-1) % L]
        x_next = pltpu.roll(x, shift=L - 1, axis=0)  # x[(t+1) % L]
        x3_rows.append(jnp.concatenate([x_prev, x, x_next], axis=-1))  # (L, 3*c_in)
    x3 = x3_rows[0] if bt == 1 else jnp.concatenate(x3_rows, axis=0)   # (Bt*L, 3*c_in)
    # Single fused MXU pass with f32 accumulation.
    acc = jnp.dot(x3, w_ref[...], preferred_element_type=jnp.float32)  # (Bt*L, d_model)
    o_ref[...] = acc.reshape(o_ref.shape).astype(o_ref.dtype)


def _pick_block_b(B, L, c_in, d_model, itemsize):
    """Batch tile: amortize ~0.35us/step overhead, keep >=2 parallel grid steps
    (v7x megacore), and bound the double-buffered per-step working set."""
    if B <= 1:
        return max(B, 1)
    budget = 8 * 1024 * 1024                      # bytes for x + out blocks (x2 buffers)
    per_b = 2 * L * (c_in + d_model) * itemsize
    bt = max(1, min(B // 2, budget // per_b))
    while B % bt:                                 # full blocks only
        bt -= 1
    return bt


def token_embedding(x, conv_weight, *, block_b=None):
    """Pallas equivalent of TokenEmbedding(c_in, d_model)(x).

    x:           (B, L, c_in) float32
    conv_weight: (d_model, c_in, 3) float32  (PyTorch Conv1d weight layout)
    returns:     (B, L, d_model) float32
    """
    B, L, c_in = x.shape
    d_model = conv_weight.shape[0]
    assert conv_weight.shape == (d_model, c_in, 3)

    # Fused weight: rows [W0; W1; W2] with Wk = conv_weight[:, :, k].T
    #   -> (3*c_in, d_model) so the kernel does one (Bt*L, 3*c_in) @ (3*c_in, d_model).
    w2d = jnp.transpose(conv_weight, (2, 1, 0)).reshape(3 * c_in, d_model)

    itemsize = jnp.dtype(x.dtype).itemsize
    if block_b is None:
        block_b = _pick_block_b(B, L, c_in, d_model, itemsize)
    assert B % block_b == 0
    grid = (B // block_b,)

    flops = 2 * B * L * (3 * c_in) * d_model
    bytes_accessed = itemsize * (B * L * c_in + B * L * d_model) + 4 * 3 * c_in * d_model

    return pl.pallas_call(
        _token_embedding_kernel,
        out_shape=jax.ShapeDtypeStruct((B, L, d_model), x.dtype),
        grid=grid,
        in_specs=[
            # per-step batch tile of the sequence
            pl.BlockSpec((block_b, L, c_in), lambda i: (i, 0, 0)),
            # grid-invariant fused weight: whole array kept VMEM-resident,
            # no per-step double-buffered DMA.
            pl.BlockSpec(memory_space=pltpu.MemorySpace.VMEM),
        ],
        out_specs=pl.BlockSpec((block_b, L, d_model), lambda i: (i, 0, 0)),
        compiler_params=pltpu.CompilerParams(
            dimension_semantics=("parallel",)),
        cost_estimate=pl.CostEstimate(
            flops=flops, transcendentals=0, bytes_accessed=bytes_accessed),
    )(x, w2d)


def _reference(x, conv_weight):
    # Pure-JAX reference mirroring Conv1d(kernel=3, circular padding=1, no bias).
    w0 = conv_weight[:, :, 0].T
    w1 = conv_weight[:, :, 1].T
    w2 = conv_weight[:, :, 2].T
    x_prev = jnp.roll(x, 1, axis=1)
    x_next = jnp.roll(x, -1, axis=1)
    dot = functools.partial(jnp.einsum, "blc,cd->bld",
                            precision=lax.Precision.HIGHEST)
    return dot(x_prev, w0) + dot(x, w1) + dot(x_next, w2)


if __name__ == "__main__":
    key = jax.random.PRNGKey(0)
    kx, kw = jax.random.split(key)

    batch, seq, c_in, d_model = 2, 16, 8, 128

    x = jax.random.normal(kx, (batch, seq, c_in), dtype=jnp.float32)

    # Kaiming-normal (fan_in, leaky_relu) init of the Conv1d weight, as in __init__.
    fan_in = c_in * 3
    std = math.sqrt(2.0 / (1.0 + 0.01 ** 2)) / math.sqrt(fan_in)
    conv_weight = std * jax.random.normal(kw, (d_model, c_in, 3), dtype=jnp.float32)

    ref = _reference(x, conv_weight)

    # Default path: Bt=1 -> grid=(2,), two "parallel" steps (one per v7x TensorCore).
    out = jax.block_until_ready(token_embedding(x, conv_weight))
    assert out.shape == (batch, seq, d_model), out.shape
    assert out.dtype == jnp.float32
    assert jnp.allclose(out, ref, atol=2e-3, rtol=2e-3), (
        float(jnp.max(jnp.abs(out - ref))))

    # Batched path: Bt=2 -> one grid step, a single (Bt*L, 3*c_in) fused matmul.
    out_b = jax.block_until_ready(token_embedding(x, conv_weight, block_b=2))
    assert jnp.allclose(out_b, ref, atol=2e-3, rtol=2e-3), (
        float(jnp.max(jnp.abs(out_b - ref))))

    print("KERNEL_OK")
</pallas_src>

<mosaic_0001>
module attributes {stable_mosaic.version = 11 : i64} {
  func.func @_token_embedding_kernel(%arg0: i32, %arg1: memref<1x16x8xf32, #tpu.memory_space<vmem>>, %arg2: memref<24x128xf32, #tpu.memory_space<vmem>>, %arg3: memref<1x16x128xf32, #tpu.memory_space<vmem>>) attributes {dimension_semantics = [#tpu.dimension_semantics<parallel>], iteration_bounds = array<i64: 2>, scalar_prefetch = 0 : i64, scratch_operands = 0 : i64, tpu.core_type = #tpu.core_type<tc>, window_params = [{transform_indices = @transform_0, window_bounds = array<i64: 1, 16, 8>}, {pipeline_mode = #tpu.pipeline_mode<synchronous>, transform_indices = @transform_1, window_bounds = array<i64: 24, 128>}, {transform_indices = @transform_2, window_bounds = array<i64: 1, 16, 128>}]} {
    %c0 = arith.constant 0 : index
    %c0_0 = arith.constant 0 : index
    %c0_1 = arith.constant 0 : index
    %0 = vector.load %arg1[%c0, %c0_0, %c0_1] : memref<1x16x8xf32, #tpu.memory_space<vmem>>, vector<1x16x8xf32>
    %1 = vector.shape_cast %0 : vector<1x16x8xf32> to vector<16x8xf32>
    %c1_i32 = arith.constant 1 : i32
    %2 = tpu.dynamic_rotate %1 by %c1_i32 dim 0 : vector<16x8xf32>, i32 -> vector<16x8xf32>
    %c15_i32 = arith.constant 15 : i32
    %3 = tpu.dynamic_rotate %1 by %c15_i32 dim 0 : vector<16x8xf32>, i32 -> vector<16x8xf32>
    %4 = tpu.concatenate %2, %1, %3 in 1 : vector<16x8xf32>, vector<16x8xf32>, vector<16x8xf32> -> vector<16x24xf32>
    %c0_2 = arith.constant 0 : index
    %c0_3 = arith.constant 0 : index
    %5 = vector.load %arg2[%c0_2, %c0_3] : memref<24x128xf32, #tpu.memory_space<vmem>>, vector<24x128xf32>
    %cst = arith.constant dense<0.000000e+00> : vector<16x128xf32>
    %6 = tpu.matmul %4, %5, %cst {dimension_numbers = #tpu.dot_dimension_numbers<[1], [0], [0], [1], [0, 0, 1, 1], [], []>} : vector<16x24xf32>, vector<24x128xf32>, vector<16x128xf32> -> vector<16x128xf32>
    %7 = vector.shape_cast %6 : vector<16x128xf32> to vector<1x16x128xf32>
    %c0_4 = arith.constant 0 : index
    %c0_5 = arith.constant 0 : index
    %c0_6 = arith.constant 0 : index
    %8 = vector.load %arg3[%c0_4, %c0_5, %c0_6] : memref<1x16x128xf32, #tpu.memory_space<vmem>>, vector<1x16x128xf32>
    tpu.vector_store %arg3[%c0_4, %c0_5, %c0_6], %7 {strides = array<i32>} : memref<1x16x128xf32, #tpu.memory_space<vmem>>, vector<1x16x128xf32>,
    return
  }
  func.func @transform_0(%arg0: i32) -> (i32, i32, i32) {
    %c0_i32 = arith.constant 0 : i32
    %c0_i32_0 = arith.constant 0 : i32
    %c0_i32_1 = arith.constant 0 : i32
    return %arg0, %c0_i32, %c0_i32_0 : i32, i32, i32
  }
  func.func @transform_1(%arg0: i32) -> (i32, i32) {
    %c0_i32 = arith.constant 0 : i32
    %c0_i32_0 = arith.constant 0 : i32
    %c0_i32_1 = arith.constant 0 : i32
    return %c0_i32, %c0_i32_0 : i32, i32
  }
  func.func @transform_2(%arg0: i32) -> (i32, i32, i32) {
    %c0_i32 = arith.constant 0 : i32
    %c0_i32_0 = arith.constant 0 : i32
    %c0_i32_1 = arith.constant 0 : i32
    return %arg0, %c0_i32, %c0_i32_0 : i32, i32, i32
  }
}

</mosaic_0001>

<llo_original>
// kernel: tpu_custom_call.1
$region0: #{tpu_custom_call.1}
  #allocation0 [shape = 'u32[]', space=smem, size = 0x4, offset = 0x4, fixed_abs, tag = 'smem constant byte address 0x4 - core index']
  #allocation1 [shape = 'u32[144,128]{1,0:T(1,128)}', space=vmem, size = 0x12000, scoped, tag = 'internal scratch']
  %s0 = inlined_call_operand.vmem [shape: f32[2,16,8], index: 0, kind: input, shape index: {}]
  %s1 = inlined_call_operand.vmem [shape: f32[24,128], index: 1, kind: input, shape index: {}]
  %s2 = inlined_call_operand.hbm [shape: f32[2,16,128], index: 2, kind: output, shape index: {}]
  %s3 = sld [smem:[#allocation0]]
  $region41: #{tpu_custom_call.1} parent=0
    _
  %s5 = ssub.s32 1, %s3
  %s6 = scalar_select 0, %s5, %s3
  $region1: #{tpu_custom_call.1} parent=0
    #allocation2 [shape = 'u8[16384]{0}', space=vmem, size = 0x4000, scoped, tag = 'output window, operand 0']
    #allocation3 [shape = 's32[2]{0}', space=sflag, size = 0x8, scoped, tag = 'scoped memory for tpu_custom_call.1']
    %7 = vsyncpa [#allocation3], 0
    %s8 = scalar_lea.sflag [#allocation3], 1
    %9 = vsyncpa %s8, 0
    loop: start=0, step=1, limit=4
    $region2: #{tpu_custom_call.1} parent=1 // loop_pre_header
      _
    $region3: #{tpu_custom_call.1} parent=1 // loop_header
      %s11 = sphi 0, %s15
      %p12 = scmp.ge.s32.totalorder %s11, 4
      %s21 = sphi 0, %s23
      %s24 = sphi 0, %s21
      %s25 = sphi 0, %s24
      %s41 = sphi 0, %s25
      %s45 = sphi 0, %s45
      %s47 = sphi 0, %s45
      %s48 = sphi 0, %s47
      %s62 = sphi 0, %s48
      %s68 = sphi 0, %s70
      %s71 = sphi 0, %s68
      %s72 = sphi 0, %s71
      %s88 = sphi 0, %s72
    $region4: #{tpu_custom_call.1} parent=1 // loop_header_branch
      %14 = sbr.rel (%p12) target = $region8
    $region5: #{tpu_custom_call.1} parent=1 // loop_body
      %s16 = ssub.s32 %s11, 1
      %s17 = ssub.s32 %s11, 2
      %s18 = sadd.s32 %s11, 1
      %s19 = ssub.s32 %s11, %s18
      %p20 = scmp.eq.s32.totalorder %s19, 0
      %s22 = sadd.s32 %s21, 1
      %s23 = scalar_select %p20, %s21, %s22
      %p26 = pneg %p20
      %p27 = scmp.eq.s32.totalorder %s11, 1
      %p28 = por %p26, %p27
      %p29 = scmp.ne.s32.totalorder %s21, %s24
      %p30 = scmp.eq.s32.totalorder %s11, 0
      %p31 = por %p29, %p30
      %p32 = scmp.ne.s32.totalorder %s21, %s24
      %p33 = scmp.eq.s32.totalorder %s16, 1
      %p34 = por %p32, %p33
      %p35 = scmp.ne.s32.totalorder %s24, %s25
      %p36 = scmp.eq.s32.totalorder %s16, 0
      %p37 = por %p35, %p36
      %p38 = scmp.ne.s32.totalorder %s24, %s25
      %p39 = scmp.eq.s32.totalorder %s17, 1
      %p40 = por %p38, %p39
      %p42 = scmp.ne.s32.totalorder %s25, %s41
      %p43 = scmp.eq.s32.totalorder %s17, 0
      %p44 = por %p42, %p43
      %s46 = sadd.s32 %s45, 1
      %p49 = scmp.eq.s32.totalorder %s11, 1
      %p50 = scmp.ne.s32.totalorder %s45, %s47
      %p51 = scmp.eq.s32.totalorder %s11, 0
      %p52 = por %p50, %p51
      %p53 = scmp.ne.s32.totalorder %s45, %s47
      %p54 = scmp.eq.s32.totalorder %s16, 1
      %p55 = por %p53, %p54
      %p56 = scmp.ne.s32.totalorder %s47, %s48
      %p57 = scmp.eq.s32.totalorder %s16, 0
      %p58 = por %p56, %p57
      %p59 = scmp.ne.s32.totalorder %s47, %s48
      %p60 = scmp.eq.s32.totalorder %s17, 1
      %p61 = por %p59, %p60
      %p63 = scmp.ne.s32.totalorder %s48, %s62
      %p64 = scmp.eq.s32.totalorder %s17, 0
      %p65 = por %p63, %p64
      %s66 = ssub.s32 %s11, %s18
      %p67 = scmp.eq.s32.totalorder %s66, 0
      %s69 = sadd.s32 %s68, 1
      %s70 = scalar_select %p67, %s68, %s69
      %p73 = pneg %p67
      %p74 = scmp.eq.s32.totalorder %s11, 1
      %p75 = por %p73, %p74
      %p76 = scmp.ne.s32.totalorder %s68, %s71
      %p77 = scmp.eq.s32.totalorder %s11, 0
      %p78 = por %p76, %p77
      %p79 = scmp.ne.s32.totalorder %s68, %s71
      %p80 = scmp.eq.s32.totalorder %s16, 1
      %p81 = por %p79, %p80
      %p82 = scmp.ne.s32.totalorder %s71, %s72
      %p83 = scmp.eq.s32.totalorder %s16, 0
      %p84 = por %p82, %p83
      %p85 = scmp.ne.s32.totalorder %s71, %s72
      %p86 = scmp.eq.s32.totalorder %s17, 1
      %p87 = por %p85, %p86
      %p89 = scmp.ne.s32.totalorder %s72, %s88
      %p90 = scmp.eq.s32.totalorder %s17, 0
      %p91 = por %p89, %p90
      %p92 = scmp.le.s32.totalorder 1, %s11
      %p93 = scmp.lt.s32.totalorder %s11, 3
      %p94 = pnand %p92, %p93
      %p95 = pneg %p94
      // Predicated region
      $region9: #{tpu_custom_call.1} parent=5 // pred_check
        _
      $region10: #{tpu_custom_call.1} parent=5 // pred_check_branch
        %97 = sbr.rel (%p94) target = $region12
      $region11: #{tpu_custom_call.1} parent=5 // pred_region
        %s98 = ssub.s32 %s11, 1
        // Predicated region
        $region13: #{tpu_custom_call.1} parent=11 // pred_check
          %p99 = pneg %p58
        $region14: #{tpu_custom_call.1} parent=11 // pred_check_branch
          %101 = sbr.rel (%p99) target = $region16
        $region15: #{tpu_custom_call.1} parent=11 // pred_region
          _
        $region16: #{tpu_custom_call.1} parent=11 // pred_fallthru
          _
      $region12: #{tpu_custom_call.1} parent=5 // pred_fallthru
        _
      %p102 = scmp.lt.s32.totalorder %s11, 2
      // Predicated region
      $region17: #{tpu_custom_call.1} parent=5 // pred_check
        %p103 = pneg %p102
      $region18: #{tpu_custom_call.1} parent=5 // pred_check_branch
        %105 = sbr.rel (%p103) target = $region20
      $region19: #{tpu_custom_call.1} parent=5 // pred_region
        // Predicated region
        $region21: #{tpu_custom_call.1} parent=19 // pred_check
          %p106 = pneg %p31
        $region22: #{tpu_custom_call.1} parent=19 // pred_check_branch
          %108 = sbr.rel (%p106) target = $region24
        $region23: #{tpu_custom_call.1} parent=19 // pred_region
          %p109 = scmp.lt.s32.totalorder %s11, 1
          %s110 = scalar_select %p109, %s11, 1
          %s111 = smul.addr %s110, 2
          %s112 = smul.addr %s111, 8
          %s113 = scalar_lea.vmem %s0, %s112
        $region24: #{tpu_custom_call.1} parent=19 // pred_fallthru
          _
      $region20: #{tpu_custom_call.1} parent=5 // pred_fallthru
        _
      %p114 = scmp.le.s32.totalorder 1, %s11
      %p115 = scmp.lt.s32.totalorder %s11, 3
      %p116 = pnand %p114, %p115
      %p117 = pneg %p116
      // Predicated region
      $region25: #{tpu_custom_call.1} parent=5 // pred_check
        _
      $region26: #{tpu_custom_call.1} parent=5 // pred_check_branch
        %119 = sbr.rel (%p116) target = $region28
      $region27: #{tpu_custom_call.1} parent=5 // pred_region
        %s120 = ssub.s32 %s11, 1
        %p121 = scmp.lt.s32.totalorder %s16, 1
        %s122 = scalar_select %p121, %s16, 1
        %s123 = smul.addr %s122, 2
        %s124 = smul.addr %s123, 8
        %s125 = scalar_lea.vmem %s0, %s124
        %p126 = pneg %p37
        %p127 = pneg %p34
        %p128 = pneg %p58
        %p129 = pneg %p55
        %p130 = pneg %p84
        %p131 = pneg %p81
        %s132 = sand.u32 %s71, 1
        %s133 = scalar_lea.sflag [#allocation3], %s132
        %s134 = sand.u32 %s71, 1
        %s135 = smul.addr %s134, 16
        %s136 = scalar_lea.vmem [#allocation2], %s135
        %p137 = scmp.lt.s32.totalorder %s16, 1
        %s138 = scalar_select %p137, %s16, 1
        %s139 = smul.addr %s138, 2
        %s140 = smul.addr %s139, 8
        %s141 = scalar_lea.vmem %s0, %s140
        %v142 = vld [vmem:[%s141] sm:$0xff]
        %v143 = vld [vmem:[%s141 + $0x8] sm:$0xff]
        %v144 = vrot.slane %v142, 7
        %v145 = vrot.slane %v143, 7
        %v146 = vlaneseq
        %v147 = vshrl.u32 %v146, 7
        %vm148 = vcmp.lt.s32.totalorder %v147, 1
        %v149 = vsel %vm148, %v144, %v145
        %v150 = vsel %vm148, %v145, %v144
        %v151 = vrot.slane %v142, 1
        %v152 = vrot.slane %v143, 1
        %vm153 = vcmp.lt.s32.totalorder %v147, 7
        %v154 = vsel %vm153, %v151, %v152
        %v155 = vsel %vm153, %v152, %v151
        %158 = vrot.lane.b32.xlu0 %v142, 8
        %v159 = vpop.permute.xlu0 %158
        %160 = vrot.lane.b32.xlu0 %v143, 8
        %v161 = vpop.permute.xlu0 %160
        %166 = vrot.lane.b32.xlu0 %v154, 16
        %v167 = vpop.permute.xlu0 %166
        %168 = vrot.lane.b32.xlu0 %v155, 16
        %v169 = vpop.permute.xlu0 %168
        %vm172 = vcmask 64512
        %v173 = vsel %vm172, %v150, %v159
        %v174 = vsel %vm172, %v149, %v161
        %vm175 = vcmask 130048
        %v176 = vsel %vm175, %v173, %v167
        %v177 = vsel %vm175, %v174, %v169
        %v178 = vld [vmem:[%s1] sm:$0xff]
        %v179 = vld [vmem:[%s1 + $0x8] sm:$0xff]
        %v180 = vld [vmem:[%s1 + $0x10] sm:$0xff]
        %vm181 = vcmask 195584
        %v183 = vsel %vm181, %v176, 0
        %v186 = vsel %vm181, %v177, 0
        %188 = vmatprep.subr.mxu0 0.0
        %189 = vmatpush1.msra.mxu0 %v178
        %190 = vmatprep.subr.mxu0 0.0
        %191 = vmatpush1.msra.mxu0 %v179
        %192 = vmatprep.subr.mxu0 0.0
        %193 = vmatpush1.msra.mxu0 %v180
        %194 = vmatprep.subr.mxu0 0.0
        %195 = vmatpush1.msra.mxu0 0.0
        %196 = vmatprep.subr.mxu0 0.0
        %197 = vmatpush1.msra.mxu0 0.0
        %198 = vmatprep.subr.mxu0 0.0
        %199 = vmatpush1.msra.mxu0 0.0
        %200 = vmatprep.subr.mxu0 0.0
        %201 = vmatpush1.msra.mxu0 0.0
        %202 = vmatprep.subr.mxu0 0.0
        %203 = vmatpush1.msra.mxu0 0.0
        %204 = vmatprep.subr.mxu0 0.0
        %205 = vmatpush1.msra.mxu0 0.0
        %206 = vmatprep.subr.mxu0 0.0
        %207 = vmatpush1.msra.mxu0 0.0
        %208 = vmatprep.subr.mxu0 0.0
        %209 = vmatpush1.msra.mxu0 0.0
        %210 = vmatprep.subr.mxu0 0.0
        %211 = vmatpush1.msra.mxu0 0.0
        %212 = vmatprep.subr.mxu0 0.0
        %213 = vmatpush1.msra.mxu0 0.0
        %214 = vmatprep.subr.mxu0 0.0
        %215 = vmatpush1.msra.mxu0 0.0
        %216 = vmatprep.subr.mxu0 0.0
        %217 = vmatpush1.msra.mxu0 0.0
        %218 = vmatprep.subr.mxu0 0.0
        %219 = vmatpush1.msra.mxu0 0.0
        %220 = vmatprep.subr.mxu0 0.0
        %221 = vmatpush1.msra.mxu0 0.0
        %222 = vmatprep.subr.mxu0 0.0
        %223 = vmatpush1.msra.mxu0 0.0
        %224 = vmatprep.subr.mxu0 0.0
        %225 = vmatpush1.msra.mxu0 0.0
        %226 = vmatprep.subr.mxu0 0.0
        %227 = vmatpush1.msra.mxu0 0.0
        %228 = vmatprep.subr.mxu0 0.0
        %229 = vmatpush1.msra.mxu0 0.0
        %230 = vmatprep.subr.mxu0 0.0
        %231 = vmatpush1.msra.mxu0 0.0
        %232 = vmatprep.subr.mxu0 0.0
        %233 = vmatpush1.msra.mxu0 0.0
        %234 = vmatprep.subr.mxu0 0.0
        %235 = vmatpush1.msra.mxu0 0.0
        %236 = vmatprep.subr.mxu0 0.0
        %237 = vmatpush1.msra.mxu0 0.0
        %238 = vmatprep.subr.mxu0 0.0
        %239 = vmatpush1.msra.mxu0 0.0
        %240 = vmatprep.subr.mxu0 0.0
        %241 = vmatpush1.msra.mxu0 0.0
        %242 = vmatprep.subr.mxu0 0.0
        %243 = vmatpush1.msra.mxu0 0.0
        %244 = vmatprep.subr.mxu0 0.0
        %245 = vmatpush1.msra.mxu0 0.0
        %246 = vmatprep.subr.mxu0 0.0
        %247 = vmatpush1.msra.mxu0 0.0
        %248 = vmatprep.subr.mxu0 0.0
        %249 = vmatpush1.msra.mxu0 0.0
        %250 = vmatprep.subr.mxu0 0.0
        %251 = vmatpush1.msra.mxu0 0.0
        %252 = vmatprep.mubr.f32.mxu0 0.0
        %253 = vmatmul.mubr.f32.gmra.mrb[0].mxu0 %v183
        %v254 = vpop.f32.mrb[0].mxu0
        %v255 = vadd.f32 0.0, %v254
        %v256 = vpop.f32.mrb[0].mxu0
        %257 = vmatprep.mubr.f32.mxu0 0.0
        %258 = vmatmul.mubr.f32.gmra.mrb[0].mxu0 %v186
        %v259 = vpop.f32.mrb[0].mxu0
        %v260 = vadd.f32 0.0, %v259
        %v261 = vpop.f32.mrb[0].mxu0
        %262 = vdwg.mxu0
        %263 = vst [vmem:[%s136] sm:$0xff] %v255
        %264 = vst [vmem:[%s136 + $0x8] sm:$0xff] %v260
        %s265 = sand.u32 %s71, 1
        %s266 = scalar_lea.sflag [#allocation3], %s265
        %s267 = sand.u32 %s71, 1
        %s268 = smul.addr %s267, 16
        %s269 = scalar_lea.vmem [#allocation2], %s268
        // Predicated region
        $region29: #{tpu_custom_call.1} parent=27 // pred_check
          %p270 = pneg %p81
        $region30: #{tpu_custom_call.1} parent=27 // pred_check_branch
          %272 = sbr.rel (%p270) target = $region32
        $region31: #{tpu_custom_call.1} parent=27 // pred_region
          %s274 = ssub.s32 256, 256
          %275 = vsyncadd %s266, %s274
          %s276 = smul.addr %s16, 2
          %s277 = smul.addr %s276, 128
          %s278 = scalar_lea.hbm %s2, %s277
          %s279 = sshll.u32 %s269, 4
          %s280 = int_to_ptr.vmem [resolvable:$true] %s279
          %285 = dma.vmem_to_hbm [thread:$0]  %s280, 256, %s278, %s266, 128, 128, 8
        $region32: #{tpu_custom_call.1} parent=27 // pred_fallthru
          _
      $region28: #{tpu_custom_call.1} parent=5 // pred_fallthru
        _
      %p286 = scmp.le.s32.totalorder 2, %s11
      // Predicated region
      $region33: #{tpu_custom_call.1} parent=5 // pred_check
        %p287 = pneg %p286
      $region34: #{tpu_custom_call.1} parent=5 // pred_check_branch
        %289 = sbr.rel (%p287) target = $region36
      $region35: #{tpu_custom_call.1} parent=5 // pred_region
        %s290 = ssub.s32 %s11, 2
        // Predicated region
        $region37: #{tpu_custom_call.1} parent=35 // pred_check
          %p291 = pneg %p87
        $region38: #{tpu_custom_call.1} parent=35 // pred_check_branch
          %293 = sbr.rel (%p291) target = $region40
        $region39: #{tpu_custom_call.1} parent=35 // pred_region
          %s294 = sand.u32 %s72, 1
          %s295 = scalar_lea.sflag [#allocation3], %s294
          %s296 = sand.u32 %s72, 1
          %s297 = smul.addr %s296, 16
          %s298 = scalar_lea.vmem [#allocation2], %s297
          %299 = dma.done %s295, 256
        $region40: #{tpu_custom_call.1} parent=35 // pred_fallthru
          _
      $region36: #{tpu_custom_call.1} parent=5 // pred_fallthru
        _
    $region6: #{tpu_custom_call.1} parent=1 // loop_footer
      %s15 = sadd.s32 1, %s11
    $region7: #{tpu_custom_call.1} parent=1 // loop_footer_branch
      %10 = sbr.rel target = $region3
    $region8: #{tpu_custom_call.1} parent=1 // loop_exit
      _
    %300 = vsyncpa [#allocation3], 1
    %s301 = scalar_lea.sflag [#allocation3], 1
    %302 = vsyncpa %s301, 1

</llo_original>
